<compile_context>
chip_gen: v5e
topology: v5e:2x2
jax: 0.10.0
libtpu: 0.0.40
codegen_flags: <defaults>
</compile_context>

<pallas_src>
import jax
import jax.numpy as jnp
from jax.experimental import pallas as pl
from jax.experimental.pallas import tpu as pltpu

_LANE = 128          # lane width: feature dims padded to a multiple of this
_SUBLANE = 8         # sublane width: batch padded to a multiple of this
_MAX_BATCH_TILE = 512


def _round_up(x, m):
    return (x + m - 1) // m * m


def _fused_mlp_kernel(x_ref,
                      w1_ref, b1_ref,
                      w2_ref, b2_ref,
                      w3_ref, b3_ref,
                      w4_ref, b4_ref,
                      o_ref):
    """One batch tile through all four layers; activations never leave VMEM.

    x: (TB, In_p); w_i: (in_i_p, out_i_p); b_i: (1, out_i_p); o: (TB, Out_p).
    Matmuls run on the MXU with bf16 operands and f32 accumulation; bias-add /
    ReLU act on the f32 accumulator; activations are cast back to the weight
    dtype only to feed the next matmul.
    """
    cdt = w1_ref.dtype  # compute (operand) dtype, normally bfloat16

    h = jnp.dot(x_ref[...].astype(cdt), w1_ref[...],
                preferred_element_type=jnp.float32)
    h = jnp.maximum(h + b1_ref[...], 0.0)

    h = jnp.dot(h.astype(cdt), w2_ref[...], preferred_element_type=jnp.float32)
    h = jnp.maximum(h + b2_ref[...], 0.0)

    h = jnp.dot(h.astype(cdt), w3_ref[...], preferred_element_type=jnp.float32)
    h = jnp.maximum(h + b3_ref[...], 0.0)

    h = jnp.dot(h.astype(cdt), w4_ref[...], preferred_element_type=jnp.float32)
    h = h + b4_ref[...]

    o_ref[...] = h.astype(o_ref.dtype)


class MLPPallas:
    """JAX/Pallas equivalent of the PyTorch MLP (4 Linear layers, 3 ReLUs)."""

    def __init__(self, input_size, hidden_size, output_size, key,
                 dtype=jnp.bfloat16):
        self.input_size = int(input_size)
        self.hidden_size = int(hidden_size)
        self.output_size = int(output_size)
        self.dtype = jnp.dtype(dtype)

        dims = [self.input_size, self.hidden_size, self.hidden_size,
                self.hidden_size, self.output_size]
        padded_dims = [_round_up(d, _LANE) for d in dims]
        self.in_p = padded_dims[0]
        self.out_p = padded_dims[-1]
        self._max_dim_p = max(padded_dims)

        self.raw_params = []     # (W (out,in), b (out,)) f32 -- PyTorch layout, for reference()
        self.padded_params = []  # (W_t (in_p,out_p), b (1,out_p)) dtype -- kernel layout
        for i in range(4):
            fan_in, fan_out = dims[i], dims[i + 1]
            in_pad, out_pad = padded_dims[i], padded_dims[i + 1]
            key, kw, kb = jax.random.split(key, 3)
            bound = 1.0 / float(fan_in) ** 0.5
            # PyTorch nn.Linear default init: U(-1/sqrt(fan_in), 1/sqrt(fan_in))
            w = jax.random.uniform(kw, (fan_out, fan_in), jnp.float32, -bound, bound)
            b = jax.random.uniform(kb, (fan_out,), jnp.float32, -bound, bound)
            self.raw_params.append((w, b))

            # Pre-transpose + zero-pad + cast once at init (not per forward).
            # Zero padding is exact: padded rows/cols contribute 0, ReLU keeps them 0.
            w_t_pad = jnp.zeros((in_pad, out_pad), self.dtype).at[:fan_in, :fan_out].set(
                w.T.astype(self.dtype))
            b_pad = jnp.zeros((1, out_pad), self.dtype).at[0, :fan_out].set(
                b.astype(self.dtype))
            self.padded_params.append((w_t_pad, b_pad))

        self._flops_per_row = 2 * sum(
            w.shape[0] * w.shape[1] for w, _ in self.padded_params)
        self._param_bytes = sum(
            (w.size + b.size) * self.dtype.itemsize for w, b in self.padded_params)

        if self._param_bytes > (100 << 20):
            # TODO(synk): N/K-tile fc2/fc3 with a reduction grid axis + f32 VMEM
            # accumulators once weights cannot stay fully VMEM-resident.
            raise NotImplementedError(
                "hidden_size too large for fully VMEM-resident weights; "
                "N/K-tiled variant not implemented")

        # Physical VMEM cap (v5e/v6e: 128 MiB, v7x: 64 MiB); fall back safely.
        try:
            info = pltpu.get_tpu_info()
            phys = int(getattr(info, "vmem_capacity_bytes", 0)) or None
        except Exception:
            phys = None
        self._vmem_cap = min(int(phys * 0.85), 100 << 20) if phys else (100 << 20)

    @staticmethod
    def _batch_tiling(batch):
        """Pick (total_padded_rows, tile_rows, n_tiles)."""
        b_pad = _round_up(batch, _SUBLANE)
        n_tiles = pl.cdiv(b_pad, _MAX_BATCH_TILE)
        if b_pad >= 2 * _SUBLANE:
            # >=2 grid steps so both v7x TensorCores get work (harmless on 1-TC chips).
            n_tiles = max(n_tiles, 2)
        tb = min(_MAX_BATCH_TILE, _round_up(pl.cdiv(b_pad, n_tiles), _SUBLANE))
        n_tiles = pl.cdiv(b_pad, tb)
        return tb * n_tiles, tb, n_tiles

    def __call__(self, x):
        B, f_in = x.shape
        assert f_in == self.input_size
        out_dtype = x.dtype

        b_total, tb, n_tiles = self._batch_tiling(B)

        # Fast path: no wrapper-side copy when already (sublane, lane) aligned.
        needs_pad = (b_total != B) or (self.in_p != f_in)
        x_in = (jnp.pad(x, ((0, b_total - B), (0, self.in_p - f_in)))
                if needs_pad else x)

        in_specs = [pl.BlockSpec((tb, self.in_p), lambda i: (i, 0))]
        args = [x_in]
        for w, b in self.padded_params:
            # Constant index_map -> single-buffer the resident weights/biases.
            in_specs.append(pl.BlockSpec(w.shape, lambda i: (0, 0),
                                         pipeline_mode=pl.Buffered(1)))
            in_specs.append(pl.BlockSpec(b.shape, lambda i: (0, 0),
                                         pipeline_mode=pl.Buffered(1)))
            args.append(w)
            args.append(b)
        out_spec = pl.BlockSpec((tb, self.out_p), lambda i: (i, 0))

        x_item = jnp.dtype(x_in.dtype).itemsize
        o_item = jnp.dtype(out_dtype).itemsize

        # VMEM budget: single-buffered params + double-buffered x/out tiles
        # + generous allowance for live f32 intermediates, then 1.5x headroom,
        # floored at the 32 MiB scoped default, capped by physical VMEM.
        needed = (self._param_bytes
                  + 2 * tb * self.in_p * x_item
                  + 2 * tb * self.out_p * o_item
                  + 4 * tb * self._max_dim_p * 4)
        vmem_limit = int(min(max(needed * 3 // 2, 32 << 20), self._vmem_cap))

        cost = pl.CostEstimate(
            flops=self._flops_per_row * b_total,
            transcendentals=0,
            bytes_accessed=(b_total * (self.in_p * x_item + self.out_p * o_item)
                            + self._param_bytes),
        )

        out_pad = pl.pallas_call(
            _fused_mlp_kernel,
            out_shape=jax.ShapeDtypeStruct((b_total, self.out_p), out_dtype),
            grid_spec=pltpu.PrefetchScalarGridSpec(
                num_scalar_prefetch=0,
                grid=(n_tiles,),
                in_specs=in_specs,
                out_specs=out_spec,
            ),
            compiler_params=pltpu.CompilerParams(
                dimension_semantics=("parallel",),   # batch tiles are independent
                vmem_limit_bytes=vmem_limit,
            ),
            cost_estimate=cost,
        )(*args)

        if b_total != B or self.out_p != self.output_size:
            out_pad = out_pad[:B, :self.output_size]
        return out_pad

    # ---------------- references (test harness only) ----------------

    def reference(self, x):
        """Pure-JAX f32 reference with PyTorch semantics (un-quantized params)."""
        h = x
        for i, (w, b) in enumerate(self.raw_params):
            h = h @ w.T + b
            if i != len(self.raw_params) - 1:
                h = jnp.maximum(h, 0.0)
        return h

    def reference_quantized(self, x):
        """Pure-JAX reference replicating the kernel's dtype casts exactly
        (bf16 operands, f32 accumulation) for a tight numeric check."""
        h = jnp.pad(x, ((0, 0), (0, self.in_p - x.shape[1])))
        for i, (w, b) in enumerate(self.padded_params):
            h = jnp.dot(h.astype(w.dtype), w, preferred_element_type=jnp.float32)
            h = h + b.astype(jnp.float32)
            if i != len(self.padded_params) - 1:
                h = jnp.maximum(h, 0.0)
        return h[:, :self.output_size].astype(x.dtype)


if __name__ == "__main__":
    key = jax.random.PRNGKey(0)
    key, k_in = jax.random.split(key)

    batch = 8
    input_size = 32
    hidden_size = 64
    output_size = 16

    x = jax.random.normal(k_in, (batch, input_size), dtype=jnp.float32)

    model = MLPPallas(input_size, hidden_size, output_size, key)

    out = model(x)
    out = jax.block_until_ready(out)
    assert out.shape == (batch, output_size)

    # Tight check vs a reference doing the exact same bf16/f32 math.
    ref_q = model.reference_quantized(x)
    assert jnp.allclose(out, ref_q, atol=1e-3, rtol=1e-3), "mismatch vs quantized ref"

    # Loose check vs the f32 PyTorch-semantics reference (bf16 weight quantization).
    ref = model.reference(x)
    assert jnp.allclose(out, ref, atol=5e-2, rtol=5e-2), "mismatch vs f32 reference"

    print("KERNEL_OK")
</pallas_src>

<mosaic_0001>
module attributes {stable_mosaic.version = 11 : i64} {
  func.func @_fused_mlp_kernel(%arg0: i32, %arg1: memref<8x128xf32, #tpu.memory_space<vmem>>, %arg2: memref<128x128xbf16, #tpu.memory_space<vmem>>, %arg3: memref<1x128xbf16, #tpu.memory_space<vmem>>, %arg4: memref<128x128xbf16, #tpu.memory_space<vmem>>, %arg5: memref<1x128xbf16, #tpu.memory_space<vmem>>, %arg6: memref<128x128xbf16, #tpu.memory_space<vmem>>, %arg7: memref<1x128xbf16, #tpu.memory_space<vmem>>, %arg8: memref<128x128xbf16, #tpu.memory_space<vmem>>, %arg9: memref<1x128xbf16, #tpu.memory_space<vmem>>, %arg10: memref<8x128xf32, #tpu.memory_space<vmem>>) attributes {dimension_semantics = [#tpu.dimension_semantics<parallel>], iteration_bounds = array<i64: 1>, scalar_prefetch = 0 : i64, scratch_operands = 0 : i64, tpu.core_type = #tpu.core_type<tc>, window_params = [{transform_indices = @transform_0, window_bounds = array<i64: 8, 128>}, {pipeline_mode = #tpu.pipeline_mode<synchronous>, transform_indices = @transform_1, window_bounds = array<i64: 128, 128>}, {pipeline_mode = #tpu.pipeline_mode<synchronous>, transform_indices = @transform_2, window_bounds = array<i64: 1, 128>}, {pipeline_mode = #tpu.pipeline_mode<synchronous>, transform_indices = @transform_3, window_bounds = array<i64: 128, 128>}, {pipeline_mode = #tpu.pipeline_mode<synchronous>, transform_indices = @transform_4, window_bounds = array<i64: 1, 128>}, {pipeline_mode = #tpu.pipeline_mode<synchronous>, transform_indices = @transform_5, window_bounds = array<i64: 128, 128>}, {pipeline_mode = #tpu.pipeline_mode<synchronous>, transform_indices = @transform_6, window_bounds = array<i64: 1, 128>}, {pipeline_mode = #tpu.pipeline_mode<synchronous>, transform_indices = @transform_7, window_bounds = array<i64: 128, 128>}, {pipeline_mode = #tpu.pipeline_mode<synchronous>, transform_indices = @transform_8, window_bounds = array<i64: 1, 128>}, {transform_indices = @transform_9, window_bounds = array<i64: 8, 128>}]} {
    %c0 = arith.constant 0 : index
    %c0_0 = arith.constant 0 : index
    %0 = vector.load %arg1[%c0, %c0_0] : memref<8x128xf32, #tpu.memory_space<vmem>>, vector<8x128xf32>
    %1 = arith.truncf %0 : vector<8x128xf32> to vector<8x128xbf16>
    %c0_1 = arith.constant 0 : index
    %c0_2 = arith.constant 0 : index
    %2 = vector.load %arg2[%c0_1, %c0_2] : memref<128x128xbf16, #tpu.memory_space<vmem>>, vector<128x128xbf16>
    %cst = arith.constant dense<0.000000e+00> : vector<8x128xf32>
    %3 = tpu.matmul %1, %2, %cst {dimension_numbers = #tpu.dot_dimension_numbers<[1], [0], [0], [1], [0, 0, 1, 1], [], []>} : vector<8x128xbf16>, vector<128x128xbf16>, vector<8x128xf32> -> vector<8x128xf32>
    %c0_3 = arith.constant 0 : index
    %c0_4 = arith.constant 0 : index
    %4 = vector.load %arg3[%c0_3, %c0_4] : memref<1x128xbf16, #tpu.memory_space<vmem>>, vector<1x128xbf16>
    %5 = arith.extf %4 : vector<1x128xbf16> to vector<1x128xf32>
    %6 = vector.broadcast %5 : vector<1x128xf32> to vector<8x128xf32>
    %7 = arith.addf %3, %6 : vector<8x128xf32>
    %cst_5 = arith.constant 0.000000e+00 : f32
    %8 = vector.broadcast %cst_5 : f32 to vector<8x128xf32>
    %9 = arith.maximumf %7, %8 : vector<8x128xf32>
    %10 = arith.truncf %9 : vector<8x128xf32> to vector<8x128xbf16>
    %c0_6 = arith.constant 0 : index
    %c0_7 = arith.constant 0 : index
    %11 = vector.load %arg4[%c0_6, %c0_7] : memref<128x128xbf16, #tpu.memory_space<vmem>>, vector<128x128xbf16>
    %cst_8 = arith.constant dense<0.000000e+00> : vector<8x128xf32>
    %12 = tpu.matmul %10, %11, %cst_8 {dimension_numbers = #tpu.dot_dimension_numbers<[1], [0], [0], [1], [0, 0, 1, 1], [], []>} : vector<8x128xbf16>, vector<128x128xbf16>, vector<8x128xf32> -> vector<8x128xf32>
    %c0_9 = arith.constant 0 : index
    %c0_10 = arith.constant 0 : index
    %13 = vector.load %arg5[%c0_9, %c0_10] : memref<1x128xbf16, #tpu.memory_space<vmem>>, vector<1x128xbf16>
    %14 = arith.extf %13 : vector<1x128xbf16> to vector<1x128xf32>
    %15 = vector.broadcast %14 : vector<1x128xf32> to vector<8x128xf32>
    %16 = arith.addf %12, %15 : vector<8x128xf32>
    %cst_11 = arith.constant 0.000000e+00 : f32
    %17 = vector.broadcast %cst_11 : f32 to vector<8x128xf32>
    %18 = arith.maximumf %16, %17 : vector<8x128xf32>
    %19 = arith.truncf %18 : vector<8x128xf32> to vector<8x128xbf16>
    %c0_12 = arith.constant 0 : index
    %c0_13 = arith.constant 0 : index
    %20 = vector.load %arg6[%c0_12, %c0_13] : memref<128x128xbf16, #tpu.memory_space<vmem>>, vector<128x128xbf16>
    %cst_14 = arith.constant dense<0.000000e+00> : vector<8x128xf32>
    %21 = tpu.matmul %19, %20, %cst_14 {dimension_numbers = #tpu.dot_dimension_numbers<[1], [0], [0], [1], [0, 0, 1, 1], [], []>} : vector<8x128xbf16>, vector<128x128xbf16>, vector<8x128xf32> -> vector<8x128xf32>
    %c0_15 = arith.constant 0 : index
    %c0_16 = arith.constant 0 : index
    %22 = vector.load %arg7[%c0_15, %c0_16] : memref<1x128xbf16, #tpu.memory_space<vmem>>, vector<1x128xbf16>
    %23 = arith.extf %22 : vector<1x128xbf16> to vector<1x128xf32>
    %24 = vector.broadcast %23 : vector<1x128xf32> to vector<8x128xf32>
    %25 = arith.addf %21, %24 : vector<8x128xf32>
    %cst_17 = arith.constant 0.000000e+00 : f32
    %26 = vector.broadcast %cst_17 : f32 to vector<8x128xf32>
    %27 = arith.maximumf %25, %26 : vector<8x128xf32>
    %28 = arith.truncf %27 : vector<8x128xf32> to vector<8x128xbf16>
    %c0_18 = arith.constant 0 : index
    %c0_19 = arith.constant 0 : index
    %29 = vector.load %arg8[%c0_18, %c0_19] : memref<128x128xbf16, #tpu.memory_space<vmem>>, vector<128x128xbf16>
    %cst_20 = arith.constant dense<0.000000e+00> : vector<8x128xf32>
    %30 = tpu.matmul %28, %29, %cst_20 {dimension_numbers = #tpu.dot_dimension_numbers<[1], [0], [0], [1], [0, 0, 1, 1], [], []>} : vector<8x128xbf16>, vector<128x128xbf16>, vector<8x128xf32> -> vector<8x128xf32>
    %c0_21 = arith.constant 0 : index
    %c0_22 = arith.constant 0 : index
    %31 = vector.load %arg9[%c0_21, %c0_22] : memref<1x128xbf16, #tpu.memory_space<vmem>>, vector<1x128xbf16>
    %32 = arith.extf %31 : vector<1x128xbf16> to vector<1x128xf32>
    %33 = vector.broadcast %32 : vector<1x128xf32> to vector<8x128xf32>
    %34 = arith.addf %30, %33 : vector<8x128xf32>
    %c0_23 = arith.constant 0 : index
    %c0_24 = arith.constant 0 : index
    %35 = vector.load %arg10[%c0_23, %c0_24] : memref<8x128xf32, #tpu.memory_space<vmem>>, vector<8x128xf32>
    tpu.vector_store %arg10[%c0_23, %c0_24], %34 {strides = array<i32>} : memref<8x128xf32, #tpu.memory_space<vmem>>, vector<8x128xf32>,
    return
  }
  func.func @transform_0(%arg0: i32) -> (i32, i32) {
    %c0_i32 = arith.constant 0 : i32
    %c0_i32_0 = arith.constant 0 : i32
    return %arg0, %c0_i32 : i32, i32
  }
  func.func @transform_1(%arg0: i32) -> (i32, i32) {
    %c0_i32 = arith.constant 0 : i32
    %c0_i32_0 = arith.constant 0 : i32
    %c0_i32_1 = arith.constant 0 : i32
    return %c0_i32, %c0_i32_0 : i32, i32
  }
  func.func @transform_2(%arg0: i32) -> (i32, i32) {
    %c0_i32 = arith.constant 0 : i32
    %c0_i32_0 = arith.constant 0 : i32
    %c0_i32_1 = arith.constant 0 : i32
    return %c0_i32, %c0_i32_0 : i32, i32
  }
  func.func @transform_3(%arg0: i32) -> (i32, i32) {
    %c0_i32 = arith.constant 0 : i32
    %c0_i32_0 = arith.constant 0 : i32
    %c0_i32_1 = arith.constant 0 : i32
    return %c0_i32, %c0_i32_0 : i32, i32
  }
  func.func @transform_4(%arg0: i32) -> (i32, i32) {
    %c0_i32 = arith.constant 0 : i32
    %c0_i32_0 = arith.constant 0 : i32
    %c0_i32_1 = arith.constant 0 : i32
    return %c0_i32, %c0_i32_0 : i32, i32
  }
  func.func @transform_5(%arg0: i32) -> (i32, i32) {
    %c0_i32 = arith.constant 0 : i32
    %c0_i32_0 = arith.constant 0 : i32
    %c0_i32_1 = arith.constant 0 : i32
    return %c0_i32, %c0_i32_0 : i32, i32
  }
  func.func @transform_6(%arg0: i32) -> (i32, i32) {
    %c0_i32 = arith.constant 0 : i32
    %c0_i32_0 = arith.constant 0 : i32
    %c0_i32_1 = arith.constant 0 : i32
    return %c0_i32, %c0_i32_0 : i32, i32
  }
  func.func @transform_7(%arg0: i32) -> (i32, i32) {
    %c0_i32 = arith.constant 0 : i32
    %c0_i32_0 = arith.constant 0 : i32
    %c0_i32_1 = arith.constant 0 : i32
    return %c0_i32, %c0_i32_0 : i32, i32
  }
  func.func @transform_8(%arg0: i32) -> (i32, i32) {
    %c0_i32 = arith.constant 0 : i32
    %c0_i32_0 = arith.constant 0 : i32
    %c0_i32_1 = arith.constant 0 : i32
    return %c0_i32, %c0_i32_0 : i32, i32
  }
  func.func @transform_9(%arg0: i32) -> (i32, i32) {
    %c0_i32 = arith.constant 0 : i32
    %c0_i32_0 = arith.constant 0 : i32
    return %arg0, %c0_i32 : i32, i32
  }
}

</mosaic_0001>

<llo_original>
// kernel: tpu_custom_call.1
$region0: #{tpu_custom_call.1}
  #allocation0 [shape = 'u32[]', space=smem, size = 0x4, offset = 0x4, fixed_abs, tag = 'smem constant byte address 0x4 - core index']
  #allocation1 [shape = 'u32[72,128]{1,0:T(1,128)}', space=vmem, size = 0x9000, scoped, tag = 'internal scratch']
  %s0 = inlined_call_operand.hbm [shape: f32[8,128], index: 0, kind: input, shape index: {}]
  %s1 = inlined_call_operand.hbm [shape: bf16[128,128], index: 1, kind: input, shape index: {}]
  %s2 = inlined_call_operand.vmem [shape: bf16[1,128], index: 2, kind: input, shape index: {}]
  %s3 = inlined_call_operand.hbm [shape: bf16[128,128], index: 3, kind: input, shape index: {}]
  %s4 = inlined_call_operand.vmem [shape: bf16[1,128], index: 4, kind: input, shape index: {}]
  %s5 = inlined_call_operand.hbm [shape: bf16[128,128], index: 5, kind: input, shape index: {}]
  %s6 = inlined_call_operand.vmem [shape: bf16[1,128], index: 6, kind: input, shape index: {}]
  %s7 = inlined_call_operand.hbm [shape: bf16[128,128], index: 7, kind: input, shape index: {}]
  %s8 = inlined_call_operand.vmem [shape: bf16[1,128], index: 8, kind: input, shape index: {}]
  %s9 = inlined_call_operand.hbm [shape: f32[8,128], index: 9, kind: output, shape index: {}]
  %s10 = sld [smem:[#allocation0]]
  $region66: #{tpu_custom_call.1} parent=0
    _
  %s12 = ssub.s32 1, %s10
  %s13 = scalar_select 0, %s12, %s10
  $region1: #{tpu_custom_call.1} parent=0
    #allocation2 [shape = 'u8[4096]{0}', space=vmem, size = 0x1000, scoped, tag = 'input window, operand 0, single buffered']
    #allocation3 [shape = 's32[1]{0}', space=sflag, size = 0x4, scoped, tag = 'scoped memory for tpu_custom_call.1']
    #allocation4 [shape = 's32[1]{0}', space=sflag, size = 0x4, scoped, tag = 'scoped memory for tpu_custom_call.1']
    #allocation5 [shape = 'u8[32768]{0}', space=vmem, size = 0x8000, scoped, tag = 'input window, operand 1, single buffered']
    #allocation6 [shape = 's32[1]{0}', space=sflag, size = 0x4, scoped, tag = 'scoped memory for tpu_custom_call.1']
    #allocation7 [shape = 'u8[32768]{0}', space=vmem, size = 0x8000, scoped, tag = 'input window, operand 3, single buffered']
    #allocation8 [shape = 'u8[32768]{0}', space=vmem, size = 0x8000, scoped, tag = 'input window, operand 5, single buffered']
    #allocation9 [shape = 's32[1]{0}', space=sflag, size = 0x4, scoped, tag = 'scoped memory for tpu_custom_call.1']
    #allocation10 [shape = 'u8[32768]{0}', space=vmem, size = 0x8000, scoped, tag = 'input window, operand 7, single buffered']
    #allocation11 [shape = 'u8[4096]{0}', space=vmem, size = 0x1000, scoped, tag = 'output window, operand 0, single buffered']
    %14 = vsyncpa [#allocation3], 0
    %15 = vsyncpa [#allocation6], 0
    %16 = vsyncpa [#allocation9], 0
    %17 = vsyncpa [#allocation4], 0
    // Predicated region
    $region2: #{tpu_custom_call.1} parent=1 // pred_check
      _
    $region3: #{tpu_custom_call.1} parent=1 // pred_check_branch
      %19 = sbr.rel (0) target = $region5
    $region4: #{tpu_custom_call.1} parent=1 // pred_region
      %21 = vsyncadd [#allocation3], 0
      %s23 = sshll.u32 %s0, 4
      %s24 = int_to_ptr.hbm [resolvable:$true] %s23
      %s25 = sshll.u32 [#allocation2], 4
      %s26 = int_to_ptr.vmem [resolvable:$true] %s25
      %28 = dma.hbm_to_vmem [thread:$0]  %s24, 128, %s26, [#allocation3]
    $region5: #{tpu_custom_call.1} parent=1 // pred_fallthru
      _
    // Predicated region
    $region6: #{tpu_custom_call.1} parent=1 // pred_check
      _
    $region7: #{tpu_custom_call.1} parent=1 // pred_check_branch
      %30 = sbr.rel (0) target = $region9
    $region8: #{tpu_custom_call.1} parent=1 // pred_region
      %32 = vsyncadd [#allocation6], 0
      %s33 = sshll.u32 %s1, 4
      %s34 = int_to_ptr.hbm [resolvable:$true] %s33
      %s35 = sshll.u32 [#allocation5], 4
      %s36 = int_to_ptr.vmem [resolvable:$true] %s35
      %41 = dma.hbm_to_vmem [thread:$0]  %s34, 1024, %s36, [#allocation6], 64, 64, 4
    $region9: #{tpu_custom_call.1} parent=1 // pred_fallthru
      _
    // Predicated region
    $region10: #{tpu_custom_call.1} parent=1 // pred_check
      _
    $region11: #{tpu_custom_call.1} parent=1 // pred_check_branch
      %43 = sbr.rel (0) target = $region13
    $region12: #{tpu_custom_call.1} parent=1 // pred_region
      _
    $region13: #{tpu_custom_call.1} parent=1 // pred_fallthru
      _
    // Predicated region
    $region14: #{tpu_custom_call.1} parent=1 // pred_check
      _
    $region15: #{tpu_custom_call.1} parent=1 // pred_check_branch
      %45 = sbr.rel (0) target = $region17
    $region16: #{tpu_custom_call.1} parent=1 // pred_region
      %47 = vsyncadd [#allocation6], 0
      %s48 = sshll.u32 %s3, 4
      %s49 = int_to_ptr.hbm [resolvable:$true] %s48
      %s50 = sshll.u32 [#allocation7], 4
      %s51 = int_to_ptr.vmem [resolvable:$true] %s50
      %56 = dma.hbm_to_vmem [thread:$0]  %s49, 1024, %s51, [#allocation6], 64, 64, 4
    $region17: #{tpu_custom_call.1} parent=1 // pred_fallthru
      _
    // Predicated region
    $region18: #{tpu_custom_call.1} parent=1 // pred_check
      _
    $region19: #{tpu_custom_call.1} parent=1 // pred_check_branch
      %58 = sbr.rel (0) target = $region21
    $region20: #{tpu_custom_call.1} parent=1 // pred_region
      _
    $region21: #{tpu_custom_call.1} parent=1 // pred_fallthru
      _
    // Predicated region
    $region22: #{tpu_custom_call.1} parent=1 // pred_check
      _
    $region23: #{tpu_custom_call.1} parent=1 // pred_check_branch
      %60 = sbr.rel (0) target = $region25
    $region24: #{tpu_custom_call.1} parent=1 // pred_region
      %62 = vsyncadd [#allocation9], 0
      %s63 = sshll.u32 %s5, 4
      %s64 = int_to_ptr.hbm [resolvable:$true] %s63
      %s65 = sshll.u32 [#allocation8], 4
      %s66 = int_to_ptr.vmem [resolvable:$true] %s65
      %71 = dma.hbm_to_vmem [thread:$0]  %s64, 1024, %s66, [#allocation9], 64, 64, 4
    $region25: #{tpu_custom_call.1} parent=1 // pred_fallthru
      _
    // Predicated region
    $region26: #{tpu_custom_call.1} parent=1 // pred_check
      _
    $region27: #{tpu_custom_call.1} parent=1 // pred_check_branch
      %73 = sbr.rel (0) target = $region29
    $region28: #{tpu_custom_call.1} parent=1 // pred_region
      _
    $region29: #{tpu_custom_call.1} parent=1 // pred_fallthru
      _
    // Predicated region
    $region30: #{tpu_custom_call.1} parent=1 // pred_check
      _
    $region31: #{tpu_custom_call.1} parent=1 // pred_check_branch
      %75 = sbr.rel (0) target = $region33
    $region32: #{tpu_custom_call.1} parent=1 // pred_region
      %77 = vsyncadd [#allocation9], 0
      %s78 = sshll.u32 %s7, 4
      %s79 = int_to_ptr.hbm [resolvable:$true] %s78
      %s80 = sshll.u32 [#allocation10], 4
      %s81 = int_to_ptr.vmem [resolvable:$true] %s80
      %86 = dma.hbm_to_vmem [thread:$0]  %s79, 1024, %s81, [#allocation9], 64, 64, 4
    $region33: #{tpu_custom_call.1} parent=1 // pred_fallthru
      _
    // Predicated region
    $region34: #{tpu_custom_call.1} parent=1 // pred_check
      _
    $region35: #{tpu_custom_call.1} parent=1 // pred_check_branch
      %88 = sbr.rel (0) target = $region37
    $region36: #{tpu_custom_call.1} parent=1 // pred_region
      _
    $region37: #{tpu_custom_call.1} parent=1 // pred_fallthru
      _
    // Predicated region
    $region38: #{tpu_custom_call.1} parent=1 // pred_check
      _
    $region39: #{tpu_custom_call.1} parent=1 // pred_check_branch
      %90 = sbr.rel (0) target = $region41
    $region40: #{tpu_custom_call.1} parent=1 // pred_region
      %92 = dma.done [#allocation3], 128
    $region41: #{tpu_custom_call.1} parent=1 // pred_fallthru
      _
    // Predicated region
    $region42: #{tpu_custom_call.1} parent=1 // pred_check
      _
    $region43: #{tpu_custom_call.1} parent=1 // pred_check_branch
      %94 = sbr.rel (0) target = $region45
    $region44: #{tpu_custom_call.1} parent=1 // pred_region
      %96 = dma.done [#allocation6], 1024
    $region45: #{tpu_custom_call.1} parent=1 // pred_fallthru
      _
    // Predicated region
    $region46: #{tpu_custom_call.1} parent=1 // pred_check
      _
    $region47: #{tpu_custom_call.1} parent=1 // pred_check_branch
      %98 = sbr.rel (0) target = $region49
    $region48: #{tpu_custom_call.1} parent=1 // pred_region
      %100 = dma.done [#allocation6], 1024
    $region49: #{tpu_custom_call.1} parent=1 // pred_fallthru
      _
    // Predicated region
    $region50: #{tpu_custom_call.1} parent=1 // pred_check
      _
    $region51: #{tpu_custom_call.1} parent=1 // pred_check_branch
      %102 = sbr.rel (0) target = $region53
    $region52: #{tpu_custom_call.1} parent=1 // pred_region
      %104 = dma.done [#allocation9], 1024
    $region53: #{tpu_custom_call.1} parent=1 // pred_fallthru
      _
    // Predicated region
    $region54: #{tpu_custom_call.1} parent=1 // pred_check
      _
    $region55: #{tpu_custom_call.1} parent=1 // pred_check_branch
      %106 = sbr.rel (0) target = $region57
    $region56: #{tpu_custom_call.1} parent=1 // pred_region
      %108 = dma.done [#allocation9], 1024
    $region57: #{tpu_custom_call.1} parent=1 // pred_fallthru
      _
    %v109 = vld [vmem:[#allocation2] sm:$0xff]
    %v110 = vpack.c.bf16 %v109, %v109
    %v111 = vld [vmem:[#allocation5] sm:$0xf]
    %v112 = vld [vmem:[#allocation5 + $0x4] sm:$0xf]
    %v113 = vld [vmem:[#allocation5 + $0x8] sm:$0xf]
    %v114 = vld [vmem:[#allocation5 + $0xc] sm:$0xf]
    %v115 = vld [vmem:[#allocation5 + $0x10] sm:$0xf]
    %v116 = vld [vmem:[#allocation5 + $0x14] sm:$0xf]
    %v117 = vld [vmem:[#allocation5 + $0x18] sm:$0xf]
    %v118 = vld [vmem:[#allocation5 + $0x1c] sm:$0xf]
    %v119 = vld [vmem:[#allocation5 + $0x20] sm:$0xf]
    %v120 = vld [vmem:[#allocation5 + $0x24] sm:$0xf]
    %v121 = vld [vmem:[#allocation5 + $0x28] sm:$0xf]
    %v122 = vld [vmem:[#allocation5 + $0x2c] sm:$0xf]
    %v123 = vld [vmem:[#allocation5 + $0x30] sm:$0xf]
    %v124 = vld [vmem:[#allocation5 + $0x34] sm:$0xf]
    %v125 = vld [vmem:[#allocation5 + $0x38] sm:$0xf]
    %v126 = vld [vmem:[#allocation5 + $0x3c] sm:$0xf]
    %v127 = vld [vmem:[%s2] sm:$0x1]
    %v128 = vunpack.c.l.bf16 %v127
    %v129 = vperm.slane %v128, 0
    %v146 = vunpack.c.l.b16 %v111
    %v147 = vunpack.c.l.b16 %v112
    %v148 = vunpack.c.l.b16 %v113
    %v149 = vunpack.c.l.b16 %v114
    %v150 = vunpack.c.l.b16 %v115
    %v151 = vunpack.c.l.b16 %v116
    %v152 = vunpack.c.l.b16 %v117
    %v153 = vunpack.c.l.b16 %v118
    %v154 = vunpack.c.l.b16 %v119
    %v155 = vunpack.c.l.b16 %v120
    %v156 = vunpack.c.l.b16 %v121
    %v157 = vunpack.c.l.b16 %v122
    %v158 = vunpack.c.l.b16 %v123
    %v159 = vunpack.c.l.b16 %v124
    %v160 = vunpack.c.l.b16 %v125
    %v161 = vunpack.c.l.b16 %v126
    %v162 = vpack.c.b16 %v147, %v146
    %v163 = vpack.c.b16 %v149, %v148
    %v164 = vpack.c.b16 %v151, %v150
    %v165 = vpack.c.b16 %v153, %v152
    %v166 = vpack.c.b16 %v155, %v154
    %v167 = vpack.c.b16 %v157, %v156
    %v168 = vpack.c.b16 %v159, %v158
    %v169 = vpack.c.b16 %v161, %v160
    %178 = vmatpush.bf16.msra.mxu0 %v169
    %179 = vmatpush.bf16.msra.mxu0 %v168
    %180 = vmatpush.bf16.msra.mxu0 %v167
    %181 = vmatpush.bf16.msra.mxu0 %v166
    %182 = vmatpush.bf16.msra.mxu0 %v165
    %183 = vmatpush.bf16.msra.mxu0 %v164
    %184 = vmatpush.bf16.msra.mxu0 %v163
    %185 = vmatpush.bf16.msra.mxu0 %v162
    %186 = vmatmul.bf16.gmra.mxu0 %v110
    %v187 = vpop.f32.mrf.mxu0
    %v188 = vadd.f32 %v129, %v187
    %v189 = vpop.f32.mrf.mxu0
    %190 = vdwg.mxu0
    %v191 = vmax.f32 %v188, 0.0
    %v192 = vpack.c.bf16 %v191, %v191
    %v193 = vld [vmem:[#allocation7] sm:$0xf]
    %v194 = vld [vmem:[#allocation7 + $0x4] sm:$0xf]
    %v195 = vld [vmem:[#allocation7 + $0x8] sm:$0xf]
    %v196 = vld [vmem:[#allocation7 + $0xc] sm:$0xf]
    %v197 = vld [vmem:[#allocation7 + $0x10] sm:$0xf]
    %v198 = vld [vmem:[#allocation7 + $0x14] sm:$0xf]
    %v199 = vld [vmem:[#allocation7 + $0x18] sm:$0xf]
    %v200 = vld [vmem:[#allocation7 + $0x1c] sm:$0xf]
    %v201 = vld [vmem:[#allocation7 + $0x20] sm:$0xf]
    %v202 = vld [vmem:[#allocation7 + $0x24] sm:$0xf]
    %v203 = vld [vmem:[#allocation7 + $0x28] sm:$0xf]
    %v204 = vld [vmem:[#allocation7 + $0x2c] sm:$0xf]
    %v205 = vld [vmem:[#allocation7 + $0x30] sm:$0xf]
    %v206 = vld [vmem:[#allocation7 + $0x34] sm:$0xf]
    %v207 = vld [vmem:[#allocation7 + $0x38] sm:$0xf]
    %v208 = vld [vmem:[#allocation7 + $0x3c] sm:$0xf]
    %v209 = vld [vmem:[%s4] sm:$0x1]
    %v210 = vunpack.c.l.bf16 %v209
    %v211 = vperm.slane %v210, 0
    %v228 = vunpack.c.l.b16 %v193
    %v229 = vunpack.c.l.b16 %v194
    %v230 = vunpack.c.l.b16 %v195
    %v231 = vunpack.c.l.b16 %v196
    %v232 = vunpack.c.l.b16 %v197
    %v233 = vunpack.c.l.b16 %v198
    %v234 = vunpack.c.l.b16 %v199
    %v235 = vunpack.c.l.b16 %v200
    %v236 = vunpack.c.l.b16 %v201
    %v237 = vunpack.c.l.b16 %v202
    %v238 = vunpack.c.l.b16 %v203
    %v239 = vunpack.c.l.b16 %v204
    %v240 = vunpack.c.l.b16 %v205
    %v241 = vunpack.c.l.b16 %v206
    %v242 = vunpack.c.l.b16 %v207
    %v243 = vunpack.c.l.b16 %v208
    %v244 = vpack.c.b16 %v229, %v228
    %v245 = vpack.c.b16 %v231, %v230
    %v246 = vpack.c.b16 %v233, %v232
    %v247 = vpack.c.b16 %v235, %v234
    %v248 = vpack.c.b16 %v237, %v236
    %v249 = vpack.c.b16 %v239, %v238
    %v250 = vpack.c.b16 %v241, %v240
    %v251 = vpack.c.b16 %v243, %v242
    %260 = vmatpush.bf16.msra.mxu0 %v251
    %261 = vmatpush.bf16.msra.mxu0 %v250
    %262 = vmatpush.bf16.msra.mxu0 %v249
    %263 = vmatpush.bf16.msra.mxu0 %v248
    %264 = vmatpush.bf16.msra.mxu0 %v247
    %265 = vmatpush.bf16.msra.mxu0 %v246
    %266 = vmatpush.bf16.msra.mxu0 %v245
    %267 = vmatpush.bf16.msra.mxu0 %v244
    %268 = vmatmul.bf16.gmra.mxu0 %v192
    %v269 = vpop.f32.mrf.mxu0
    %v270 = vadd.f32 %v211, %v269
    %v271 = vpop.f32.mrf.mxu0
    %272 = vdwg.mxu0
    %v273 = vmax.f32 %v270, 0.0
    %v274 = vpack.c.bf16 %v273, %v273
    %v275 = vld [vmem:[#allocation8] sm:$0xf]
    %v276 = vld [vmem:[#allocation8 + $0x4] sm:$0xf]
    %v277 = vld [vmem:[#allocation8 + $0x8] sm:$0xf]
    %v278 = vld [vmem:[#allocation8 + $0xc] sm:$0xf]
    %v279 = vld [vmem:[#allocation8 + $0x10] sm:$0xf]
    %v280 = vld [vmem:[#allocation8 + $0x14] sm:$0xf]
    %v281 = vld [vmem:[#allocation8 + $0x18] sm:$0xf]
    %v282 = vld [vmem:[#allocation8 + $0x1c] sm:$0xf]
    %v283 = vld [vmem:[#allocation8 + $0x20] sm:$0xf]
    %v284 = vld [vmem:[#allocation8 + $0x24] sm:$0xf]
    %v285 = vld [vmem:[#allocation8 + $0x28] sm:$0xf]
    %v286 = vld [vmem:[#allocation8 + $0x2c] sm:$0xf]
    %v287 = vld [vmem:[#allocation8 + $0x30] sm:$0xf]
    %v288 = vld [vmem:[#allocation8 + $0x34] sm:$0xf]
    %v289 = vld [vmem:[#allocation8 + $0x38] sm:$0xf]
    %v290 = vld [vmem:[#allocation8 + $0x3c] sm:$0xf]
    %v291 = vld [vmem:[%s6] sm:$0x1]
    %v292 = vunpack.c.l.bf16 %v291
    %v293 = vperm.slane %v292, 0
    %v310 = vunpack.c.l.b16 %v275
    %v311 = vunpack.c.l.b16 %v276
    %v312 = vunpack.c.l.b16 %v277
    %v313 = vunpack.c.l.b16 %v278
    %v314 = vunpack.c.l.b16 %v279
    %v315 = vunpack.c.l.b16 %v280
    %v316 = vunpack.c.l.b16 %v281
    %v317 = vunpack.c.l.b16 %v282
    %v318 = vunpack.c.l.b16 %v283
    %v319 = vunpack.c.l.b16 %v284
    %v320 = vunpack.c.l.b16 %v285
    %v321 = vunpack.c.l.b16 %v286
    %v322 = vunpack.c.l.b16 %v287
    %v323 = vunpack.c.l.b16 %v288
    %v324 = vunpack.c.l.b16 %v289
    %v325 = vunpack.c.l.b16 %v290
    %v326 = vpack.c.b16 %v311, %v310
    %v327 = vpack.c.b16 %v313, %v312
    %v328 = vpack.c.b16 %v315, %v314
    %v329 = vpack.c.b16 %v317, %v316
    %v330 = vpack.c.b16 %v319, %v318
    %v331 = vpack.c.b16 %v321, %v320
    %v332 = vpack.c.b16 %v323, %v322
    %v333 = vpack.c.b16 %v325, %v324
    %342 = vmatpush.bf16.msra.mxu0 %v333
    %343 = vmatpush.bf16.msra.mxu0 %v332
    %344 = vmatpush.bf16.msra.mxu0 %v331
    %345 = vmatpush.bf16.msra.mxu0 %v330
    %346 = vmatpush.bf16.msra.mxu0 %v329
    %347 = vmatpush.bf16.msra.mxu0 %v328
    %348 = vmatpush.bf16.msra.mxu0 %v327
    %349 = vmatpush.bf16.msra.mxu0 %v326
    %350 = vmatmul.bf16.gmra.mxu0 %v274
    %v351 = vpop.f32.mrf.mxu0
    %v352 = vadd.f32 %v293, %v351
    %v353 = vpop.f32.mrf.mxu0
    %354 = vdwg.mxu0
    %v355 = vmax.f32 %v352, 0.0
    %v356 = vpack.c.bf16 %v355, %v355
    %v357 = vld [vmem:[#allocation10] sm:$0xf]
    %v358 = vld [vmem:[#allocation10 + $0x4] sm:$0xf]
    %v359 = vld [vmem:[#allocation10 + $0x8] sm:$0xf]
    %v360 = vld [vmem:[#allocation10 + $0xc] sm:$0xf]
    %v361 = vld [vmem:[#allocation10 + $0x10] sm:$0xf]
    %v362 = vld [vmem:[#allocation10 + $0x14] sm:$0xf]
    %v363 = vld [vmem:[#allocation10 + $0x18] sm:$0xf]
    %v364 = vld [vmem:[#allocation10 + $0x1c] sm:$0xf]
    %v365 = vld [vmem:[#allocation10 + $0x20] sm:$0xf]
    %v366 = vld [vmem:[#allocation10 + $0x24] sm:$0xf]
    %v367 = vld [vmem:[#allocation10 + $0x28] sm:$0xf]
    %v368 = vld [vmem:[#allocation10 + $0x2c] sm:$0xf]
    %v369 = vld [vmem:[#allocation10 + $0x30] sm:$0xf]
    %v370 = vld [vmem:[#allocation10 + $0x34] sm:$0xf]
    %v371 = vld [vmem:[#allocation10 + $0x38] sm:$0xf]
    %v372 = vld [vmem:[#allocation10 + $0x3c] sm:$0xf]
    %v373 = vld [vmem:[%s8] sm:$0x1]
    %v374 = vunpack.c.l.bf16 %v373
    %v375 = vperm.slane %v374, 0
    %v392 = vunpack.c.l.b16 %v357
    %v393 = vunpack.c.l.b16 %v358
    %v394 = vunpack.c.l.b16 %v359
    %v395 = vunpack.c.l.b16 %v360
    %v396 = vunpack.c.l.b16 %v361
    %v397 = vunpack.c.l.b16 %v362
    %v398 = vunpack.c.l.b16 %v363
    %v399 = vunpack.c.l.b16 %v364
    %v400 = vunpack.c.l.b16 %v365
    %v401 = vunpack.c.l.b16 %v366
    %v402 = vunpack.c.l.b16 %v367
    %v403 = vunpack.c.l.b16 %v368
    %v404 = vunpack.c.l.b16 %v369
    %v405 = vunpack.c.l.b16 %v370
    %v406 = vunpack.c.l.b16 %v371
    %v407 = vunpack.c.l.b16 %v372
    %v408 = vpack.c.b16 %v393, %v392
    %v409 = vpack.c.b16 %v395, %v394
    %v410 = vpack.c.b16 %v397, %v396
    %v411 = vpack.c.b16 %v399, %v398
    %v412 = vpack.c.b16 %v401, %v400
    %v413 = vpack.c.b16 %v403, %v402
    %v414 = vpack.c.b16 %v405, %v404
    %v415 = vpack.c.b16 %v407, %v406
    %424 = vmatpush.bf16.msra.mxu0 %v415
    %425 = vmatpush.bf16.msra.mxu0 %v414
    %426 = vmatpush.bf16.msra.mxu0 %v413
    %427 = vmatpush.bf16.msra.mxu0 %v412
    %428 = vmatpush.bf16.msra.mxu0 %v411
    %429 = vmatpush.bf16.msra.mxu0 %v410
    %430 = vmatpush.bf16.msra.mxu0 %v409
    %431 = vmatpush.bf16.msra.mxu0 %v408
    %432 = vmatmul.bf16.gmra.mxu0 %v356
    %v433 = vpop.f32.mrf.mxu0
    %v434 = vadd.f32 %v375, %v433
    %v435 = vpop.f32.mrf.mxu0
    %436 = vdwg.mxu0
    %437 = vst [vmem:[#allocation11] sm:$0xff] %v434
    // Predicated region
    $region58: #{tpu_custom_call.1} parent=1 // pred_check
      _
    $region59: #{tpu_custom_call.1} parent=1 // pred_check_branch
      %439 = sbr.rel (0) target = $region61
    $region60: #{tpu_custom_call.1} parent=1 // pred_region
      %441 = vsyncadd [#allocation4], 0
      %s443 = sshll.u32 [#allocation11], 4
      %s444 = int_to_ptr.vmem [resolvable:$true] %s443
      %s445 = sshll.u32 %s9, 4
      %s446 = int_to_ptr.hbm [resolvable:$true] %s445
      %448 = dma.vmem_to_hbm [thread:$0]  %s444, 128, %s446, [#allocation4]
    $region61: #{tpu_custom_call.1} parent=1 // pred_fallthru
      _
    // Predicated region
    $region62: #{tpu_custom_call.1} parent=1 // pred_check
      _
    $region63: #{tpu_custom_call.1} parent=1 // pred_check_branch
      %450 = sbr.rel (0) target = $region65
    $region64: #{tpu_custom_call.1} parent=1 // pred_region
      %452 = dma.done [#allocation4], 128
    $region65: #{tpu_custom_call.1} parent=1 // pred_fallthru
      _
    %453 = vsyncpa [#allocation3], 1
    %454 = vsyncpa [#allocation6], 1
    %455 = vsyncpa [#allocation9], 1
    %456 = vsyncpa [#allocation4], 1

</llo_original>
